<compile_context>
chip_gen: v6e
topology: v6e:2x2x1
jax: 0.10.0
libtpu: 0.0.40
codegen_flags: <defaults>
</compile_context>

<pallas_src>
import math

import jax
import jax.numpy as jnp
from jax.experimental import pallas as pl
from jax.experimental.pallas import tpu as pltpu


def _copy_kernel(x_ref, o_ref):
    # Identity copy of the current tile — the only "compute" a view has.
    o_ref[...] = x_ref[...]


def _resolve_shape(shape, total):
    """Resolve a single -1 like torch.view / np.reshape."""
    shape = tuple(int(s) for s in shape)
    if shape.count(-1) > 1:
        raise ValueError("view(): only one dimension can be inferred")
    if -1 in shape:
        known = math.prod(s for s in shape if s != -1)
        if known == 0 or total % known != 0:
            raise ValueError(
                f"view(): shape {shape} is invalid for input of size {total}")
        shape = tuple(total // known if s == -1 else s for s in shape)
    if math.prod(shape) != total:
        raise ValueError(
            f"view(): shape {shape} is invalid for input of size {total}")
    return shape


def pallas_reshape(x, shape):
    """Equivalent of torch `x.view(shape)`; data pass done in Pallas."""
    total = x.size
    shape = _resolve_shape(shape, total)

    LANE = 128
    if total == 0 or total % LANE != 0:
        # Not lane-dense: a view moves no data, so the metadata-only reshape
        # is exact and avoids the old whole-array-in-VMEM fallback cliff.
        return jnp.reshape(x, shape)

    # --- Lay out the row-major element stream as a wide lane-dense slab ---
    width = LANE
    for cand in (4096, 2048, 1024, 512, 256):
        if total % cand == 0:
            width = cand
            break
    rows = total // width

    itemsize = jnp.dtype(x.dtype).itemsize
    sub_mult = max(8, 32 // max(itemsize, 1))      # 8 f32 / 16 bf16 / 32 int8

    # ~4 MiB per block => ~16 MiB in flight with double-buffered in+out.
    target_block_bytes = 4 * 1024 * 1024
    tile_rows = max(sub_mult, target_block_bytes // (width * itemsize))
    tile_rows = (tile_rows // sub_mult) * sub_mult
    if tile_rows >= rows:
        tile_rows = rows                           # full-extent dim is legal

    grid = (pl.cdiv(rows, tile_rows),)             # ragged tail handled by Pallas

    flat2d = x.reshape(rows, width)
    out2d = pl.pallas_call(
        _copy_kernel,
        out_shape=jax.ShapeDtypeStruct((rows, width), x.dtype),
        grid_spec=pltpu.PrefetchScalarGridSpec(
            num_scalar_prefetch=0,
            grid=grid,
            in_specs=[pl.BlockSpec((tile_rows, width), lambda i: (i, 0))],
            out_specs=pl.BlockSpec((tile_rows, width), lambda i: (i, 0)),
        ),
        compiler_params=pltpu.CompilerParams(
            dimension_semantics=("parallel",),
            vmem_limit_bytes=32 * 1024 * 1024,
        ),
    )(flat2d)

    # Metadata-only step (same as torch .view — no data movement).
    return out2d.reshape(shape)


class Reshape:
    """JAX/Pallas counterpart of the PyTorch Reshape module."""

    def __init__(self, *args):
        self.shape = args

    def __call__(self, x):
        return pallas_reshape(x, self.shape)


if __name__ == "__main__":
    key = jax.random.PRNGKey(0)
    # Small NCHW-like input consistent with typical Reshape(batch, -1) usage.
    x = jax.random.normal(key, (2, 4, 16, 16), dtype=jnp.float32)

    # Main path: flatten per batch (mimics Reshape(batch, -1) before Linear).
    y = jax.block_until_ready(Reshape(2, -1)(x))
    ref = jnp.reshape(x, (2, -1))
    assert y.shape == (2, 4 * 16 * 16)
    assert y.dtype == x.dtype
    assert bool(jnp.array_equal(y, ref))

    # Different target shape, same Pallas copy path.
    y2 = jax.block_until_ready(Reshape(8, 16, 16)(x))
    assert bool(jnp.array_equal(y2, jnp.reshape(x, (8, 16, 16))))

    # Awkward (non-128-multiple) element count: metadata-only path.
    x_small = jax.random.normal(key, (3, 5, 7), dtype=jnp.float32)
    y3 = jax.block_until_ready(Reshape(105)(x_small))
    assert bool(jnp.array_equal(y3, jnp.reshape(x_small, (105,))))

    print("KERNEL_OK")
</pallas_src>

<mosaic_0001>
module attributes {stable_mosaic.version = 11 : i64} {
  func.func @_copy_kernel(%arg0: i32, %arg1: memref<1x2048xf32, #tpu.memory_space<vmem>>, %arg2: memref<1x2048xf32, #tpu.memory_space<vmem>>) attributes {dimension_semantics = [#tpu.dimension_semantics<parallel>], iteration_bounds = array<i64: 1>, scalar_prefetch = 0 : i64, scratch_operands = 0 : i64, tpu.core_type = #tpu.core_type<tc>, window_params = [{transform_indices = @transform_0, window_bounds = array<i64: 1, 2048>}, {transform_indices = @transform_1, window_bounds = array<i64: 1, 2048>}]} {
    %c0 = arith.constant 0 : index
    %c0_0 = arith.constant 0 : index
    %0 = vector.load %arg1[%c0, %c0_0] : memref<1x2048xf32, #tpu.memory_space<vmem>>, vector<1x2048xf32>
    %c0_1 = arith.constant 0 : index
    %c0_2 = arith.constant 0 : index
    %1 = vector.load %arg2[%c0_1, %c0_2] : memref<1x2048xf32, #tpu.memory_space<vmem>>, vector<1x2048xf32>
    tpu.vector_store %arg2[%c0_1, %c0_2], %0 {strides = array<i32>} : memref<1x2048xf32, #tpu.memory_space<vmem>>, vector<1x2048xf32>,
    return
  }
  func.func @transform_0(%arg0: i32) -> (i32, i32) {
    %c0_i32 = arith.constant 0 : i32
    %c0_i32_0 = arith.constant 0 : i32
    return %arg0, %c0_i32 : i32, i32
  }
  func.func @transform_1(%arg0: i32) -> (i32, i32) {
    %c0_i32 = arith.constant 0 : i32
    %c0_i32_0 = arith.constant 0 : i32
    return %arg0, %c0_i32 : i32, i32
  }
}

</mosaic_0001>

<llo_original>
// kernel: tpu_custom_call.1
$region0: #{tpu_custom_call.1}
  #allocation0 [shape = 'u32[]', space=smem, size = 0x4, offset = 0x4, fixed_abs, tag = 'smem constant byte address 0x4 - core index']
  #allocation1 [shape = 'u32[144,128]{1,0:T(1,128)}', space=vmem, size = 0x12000, scoped, tag = 'internal scratch']
  %s0 = inlined_call_operand.hbm [shape: f32[1,2048], index: 0, kind: input, shape index: {}]
  %s1 = inlined_call_operand.hbm [shape: f32[1,2048], index: 1, kind: output, shape index: {}]
  %s2 = sld [smem:[#allocation0]]
  $region18: #{tpu_custom_call.1} parent=0
    _
  %s4 = ssub.s32 1, %s2
  %s5 = scalar_select 0, %s4, %s2
  $region1: #{tpu_custom_call.1} parent=0
    #allocation2 [shape = 'u8[8192]{0}', space=vmem, size = 0x2000, scoped, tag = 'input window, operand 0, single buffered']
    #allocation3 [shape = 's32[1]{0}', space=sflag, size = 0x4, scoped, tag = 'scoped memory for tpu_custom_call.1']
    #allocation4 [shape = 's32[1]{0}', space=sflag, size = 0x4, scoped, tag = 'scoped memory for tpu_custom_call.1']
    #allocation5 [shape = 'u8[8192]{0}', space=vmem, size = 0x2000, scoped, tag = 'output window, operand 0, single buffered']
    %6 = vsyncpa [#allocation3], 0
    %7 = vsyncpa [#allocation4], 0
    // Predicated region
    $region2: #{tpu_custom_call.1} parent=1 // pred_check
      _
    $region3: #{tpu_custom_call.1} parent=1 // pred_check_branch
      %9 = sbr.rel (0) target = $region5
    $region4: #{tpu_custom_call.1} parent=1 // pred_region
      %s11 = ssub.s32 256, 256
      %12 = vsyncadd [#allocation3], %s11
      %s14 = sshll.u32 [#allocation2], 4
      %s15 = int_to_ptr.vmem [resolvable:$true] %s14
      %17 = dma.hbm_to_vmem [thread:$0]  %s0, 256, %s15, [#allocation3]
    $region5: #{tpu_custom_call.1} parent=1 // pred_fallthru
      _
    // Predicated region
    $region6: #{tpu_custom_call.1} parent=1 // pred_check
      _
    $region7: #{tpu_custom_call.1} parent=1 // pred_check_branch
      %19 = sbr.rel (0) target = $region9
    $region8: #{tpu_custom_call.1} parent=1 // pred_region
      %20 = dma.done [#allocation3], 256
    $region9: #{tpu_custom_call.1} parent=1 // pred_fallthru
      _
    %v21 = vld [vmem:[#allocation2] sm:$0xff]
    %v22 = vld [vmem:[#allocation2 + $0x8] sm:$0xff]
    %23 = vst [vmem:[#allocation5] sm:$0xff] %v21
    %24 = vst [vmem:[#allocation5 + $0x8] sm:$0xff] %v22
    // Predicated region
    $region10: #{tpu_custom_call.1} parent=1 // pred_check
      _
    $region11: #{tpu_custom_call.1} parent=1 // pred_check_branch
      %26 = sbr.rel (0) target = $region13
    $region12: #{tpu_custom_call.1} parent=1 // pred_region
      %s28 = ssub.s32 256, 256
      %29 = vsyncadd [#allocation4], %s28
      %s31 = sshll.u32 [#allocation5], 4
      %s32 = int_to_ptr.vmem [resolvable:$true] %s31
      %34 = dma.vmem_to_hbm [thread:$0]  %s32, 256, %s1, [#allocation4]
    $region13: #{tpu_custom_call.1} parent=1 // pred_fallthru
      _
    // Predicated region
    $region14: #{tpu_custom_call.1} parent=1 // pred_check
      _
    $region15: #{tpu_custom_call.1} parent=1 // pred_check_branch
      %36 = sbr.rel (0) target = $region17
    $region16: #{tpu_custom_call.1} parent=1 // pred_region
      %37 = dma.done [#allocation4], 256
    $region17: #{tpu_custom_call.1} parent=1 // pred_fallthru
      _
    %38 = vsyncpa [#allocation3], 1
    %39 = vsyncpa [#allocation4], 1

</llo_original>
